<compile_context>
chip_gen: v7x
topology: tpu7x:2x2x1
jax: 0.10.0
libtpu: 0.0.40
codegen_flags: <defaults>
</compile_context>

<pallas_src>
import jax
import jax.numpy as jnp
from jax.experimental import pallas as pl
from jax.experimental.pallas import tpu as pltpu

_LANE = 128
_ALIGN = 16          # bf16 sublane packing: keep batch tiles multiples of 16 rows


def _round_up(x: int, m: int) -> int:
    return ((x + m - 1) // m) * m


def _make_dqn_kernel(num_layers: int):
    """Fused MLP kernel: (x_ref, w0, b0, w1, b1, ..., out_ref).

    ReLU is applied after every layer except the last (hidden layers get
    ReLU + Dropout in the module; the final Linear(prev_dim, 2) does not).
    """

    def kernel(x_ref, *refs):
        out_ref = refs[-1]
        param_refs = refs[:-1]
        h = x_ref[...]                                # bf16 input tile
        for i in range(num_layers):
            w = param_refs[2 * i][...]                # [in, out] bf16 (or f32)
            b = param_refs[2 * i + 1][...]            # [1, out] f32, broadcasts over batch
            h = jnp.dot(h.astype(w.dtype), w, preferred_element_type=jnp.float32) + b
            if i < num_layers - 1:
                h = jnp.maximum(h, 0.0)               # ReLU on hidden layers (f32)
                # TODO(synk): training-mode nn.Dropout(0.1) would need pltpu.prng_seed +
                # pltpu.prng_random_bits masking with 1/(1-p) scaling; inference-mode
                # dropout is the identity, which is what we implement.
        out_ref[...] = h.astype(out_ref.dtype)        # lane-dense bf16 store

    return kernel


def _vmem_need_bytes(tb: int, dims, resident_weight_bytes: int) -> int:
    """Real VMEM footprint: 2x-buffered weights + double-buffered bf16 I/O tiles + f32 act."""
    max_dim = max(dims)
    io_bytes = 2 * 2 * tb * (dims[0] + dims[-1])      # double-buffered bf16 x/out tiles
    act_bytes = 2 * 4 * tb * max_dim                  # live f32 activation tiles (conservative)
    return 2 * resident_weight_bytes + io_bytes + act_bytes


def _choose_block_batch(batch, requested_tb, dims, resident_weight_bytes,
                        vmem_budget_bytes):
    """Pick a batch tile that keeps the real footprint under budget.

    Also splits the tile when the grid would otherwise have a single step, so the
    "parallel" batch axis can shard across v7x's 2 TensorCores.
    """
    batch_pad = _round_up(batch, _ALIGN)
    tb = min(_round_up(requested_tb, _ALIGN), batch_pad)
    if tb >= batch_pad and batch_pad >= 2 * _ALIGN:
        tb = _round_up(batch_pad // 2, _ALIGN)        # >= 2 grid steps for megacore
    while tb > _ALIGN and _vmem_need_bytes(tb, dims, resident_weight_bytes) > vmem_budget_bytes:
        tb = max(_ALIGN, _round_up(tb // 2, _ALIGN))
    return tb


def dqn_forward(x, params, *, block_batch=1024, weight_dtype=jnp.bfloat16,
                vmem_budget_bytes=44 << 20):
    """Run the BasicDQN forward pass in a single batch-gridded Pallas kernel.

    Args:
      x: [B, state_dim] float32 input.
      params: list of (W, b) with W: [in_dim, out_dim] (= PyTorch W.T), b: [out_dim].
      block_batch: requested batch tile (rounded/clamped internally).
      weight_dtype: storage/matmul dtype for weights (bf16 default; f32 accumulation).
    Returns:
      [B, 2] float32 Q-values.
    """
    num_layers = len(params)
    batch, state_dim = x.shape
    out_dim = params[-1][0].shape[1]

    # Pad every layer's output dim to a 128-lane multiple (zero columns are exact:
    # bias 0 -> ReLU 0 -> zero rows in the next weight contribute nothing).
    padded_out = [_round_up(max(w.shape[1], _LANE), _LANE) for (w, _) in params]
    padded_in = [state_dim] + padded_out[:-1]
    dims = [state_dim] + padded_out
    out_dim_p = padded_out[-1]

    # Flatten params; weights stored bf16 (MXU-native), biases as f32 (1, out) rows.
    # (These use constant index_maps so they stay VMEM-resident across grid steps;
    #  pipeline_mode=pl.Buffered(1) would halve their footprint if they ever get big.)
    flat_params = []
    for i, (w, b) in enumerate(params):
        w = jnp.asarray(w, jnp.float32)
        b = jnp.asarray(b, jnp.float32)
        w = jnp.pad(w, ((0, padded_in[i] - w.shape[0]), (0, padded_out[i] - w.shape[1])))
        b = jnp.pad(b, (0, padded_out[i] - b.shape[0]))
        flat_params.append(w.astype(weight_dtype))
        flat_params.append(b.reshape(1, -1))

    weight_bytes = sum(int(p.size) * p.dtype.itemsize for p in flat_params)

    # Batch tiling (bf16-sublane aligned, VMEM-budgeted, megacore-aware).
    tb = _choose_block_batch(batch, block_batch, dims, weight_bytes, vmem_budget_bytes)
    batch_p = _round_up(batch, tb)

    # Stream the input as bf16 (halves HBM input traffic and the x VMEM tile).
    x = jnp.asarray(x, jnp.float32).astype(jnp.bfloat16)
    if batch_p != batch:
        x = jnp.pad(x, ((0, batch_p - batch), (0, 0)))
    grid = (batch_p // tb,)

    # x/out tiled along batch; weights/biases resident via constant index maps.
    in_specs = [pl.BlockSpec((tb, state_dim), lambda i: (i, 0))]
    for p in flat_params:
        in_specs.append(pl.BlockSpec(p.shape, lambda i: (0, 0)))
    out_specs = pl.BlockSpec((tb, out_dim_p), lambda i: (i, 0))

    flops = 2 * batch_p * sum(a * b for a, b in zip(padded_in, padded_out))
    bytes_accessed = batch_p * state_dim * 2 + weight_bytes + batch_p * out_dim_p * 2
    cost = pl.CostEstimate(flops=int(flops), transcendentals=0,
                           bytes_accessed=int(bytes_accessed))

    # Tell the compiler the VMEM budget we actually planned for (+25% headroom),
    # clamped so it stays legal on v7x (64 MiB physical per TensorCore).
    vmem_need = _vmem_need_bytes(tb, dims, weight_bytes)
    vmem_limit = int(min(max(int(vmem_need * 1.25), 32 << 20), 56 << 20))

    out = pl.pallas_call(
        _make_dqn_kernel(num_layers),
        out_shape=jax.ShapeDtypeStruct((batch_p, out_dim_p), jnp.bfloat16),
        grid_spec=pltpu.PrefetchScalarGridSpec(
            num_scalar_prefetch=0,
            grid=grid,
            in_specs=in_specs,
            out_specs=out_specs,
        ),
        compiler_params=pltpu.CompilerParams(
            dimension_semantics=("parallel",),   # megacore batch sharding on v7x
            vmem_limit_bytes=vmem_limit,
        ),
        cost_estimate=cost,
    )(x, *flat_params)

    return out[:batch, :out_dim].astype(jnp.float32)


def init_dqn_params(key, state_dim: int, hidden_dims=(512,), out_dim: int = 2):
    """Deterministic synthetic parameters matching BasicDQN layer shapes."""
    dims = [state_dim, *hidden_dims, out_dim]
    params = []
    for i in range(len(dims) - 1):
        key, kw, kb = jax.random.split(key, 3)
        fan_in = dims[i]
        bound = 1.0 / jnp.sqrt(jnp.float32(fan_in))
        w = jax.random.uniform(kw, (dims[i], dims[i + 1]), jnp.float32, -bound, bound)
        b = jax.random.uniform(kb, (dims[i + 1],), jnp.float32, -bound, bound)
        params.append((w, b))
    return params


def dqn_reference(x, params, weight_dtype=jnp.bfloat16):
    """Plain-JAX reference (eval mode), mirroring the kernel's bf16-stream / f32-accum numerics."""
    h = jnp.asarray(x, jnp.float32).astype(weight_dtype)
    for i, (w, b) in enumerate(params):
        wq = jnp.asarray(w, jnp.float32).astype(weight_dtype)
        h = jnp.dot(h.astype(weight_dtype), wq,
                    preferred_element_type=jnp.float32) + jnp.asarray(b, jnp.float32)
        if i < len(params) - 1:
            h = jnp.maximum(h, 0.0)
    return h.astype(weight_dtype).astype(jnp.float32)   # kernel stores bf16 output


if __name__ == "__main__":
    key = jax.random.PRNGKey(0)

    # Small shapes consistent with the module: batch=2, state_dim=32, hidden_dims=[32].
    batch, state_dim = 2, 32
    hidden_dims = [32]

    kx, kp = jax.random.split(key)
    x = jax.random.normal(kx, (batch, state_dim), jnp.float32)
    params = init_dqn_params(kp, state_dim, hidden_dims)

    out = dqn_forward(x, params)
    out = jax.block_until_ready(out)

    ref = dqn_reference(x, params)
    assert out.shape == (batch, 2), out.shape
    assert jnp.allclose(out, ref, atol=2e-2, rtol=2e-2), (out, ref)

    print("KERNEL_OK")
</pallas_src>

<mosaic_0001>
module attributes {stable_mosaic.version = 11 : i64} {
  func.func @kernel(%arg0: i32, %arg1: memref<16x32xbf16, #tpu.memory_space<vmem>>, %arg2: memref<32x128xbf16, #tpu.memory_space<vmem>>, %arg3: memref<1x128xf32, #tpu.memory_space<vmem>>, %arg4: memref<128x128xbf16, #tpu.memory_space<vmem>>, %arg5: memref<1x128xf32, #tpu.memory_space<vmem>>, %arg6: memref<16x128xbf16, #tpu.memory_space<vmem>>) attributes {dimension_semantics = [#tpu.dimension_semantics<parallel>], iteration_bounds = array<i64: 1>, scalar_prefetch = 0 : i64, scratch_operands = 0 : i64, tpu.core_type = #tpu.core_type<tc>, window_params = [{transform_indices = @transform_0, window_bounds = array<i64: 16, 32>}, {pipeline_mode = #tpu.pipeline_mode<synchronous>, transform_indices = @transform_1, window_bounds = array<i64: 32, 128>}, {pipeline_mode = #tpu.pipeline_mode<synchronous>, transform_indices = @transform_2, window_bounds = array<i64: 1, 128>}, {pipeline_mode = #tpu.pipeline_mode<synchronous>, transform_indices = @transform_3, window_bounds = array<i64: 128, 128>}, {pipeline_mode = #tpu.pipeline_mode<synchronous>, transform_indices = @transform_4, window_bounds = array<i64: 1, 128>}, {transform_indices = @transform_5, window_bounds = array<i64: 16, 128>}]} {
    %c0 = arith.constant 0 : index
    %c0_0 = arith.constant 0 : index
    %0 = vector.load %arg1[%c0, %c0_0] : memref<16x32xbf16, #tpu.memory_space<vmem>>, vector<16x32xbf16>
    %c0_1 = arith.constant 0 : index
    %c0_2 = arith.constant 0 : index
    %1 = vector.load %arg2[%c0_1, %c0_2] : memref<32x128xbf16, #tpu.memory_space<vmem>>, vector<32x128xbf16>
    %c0_3 = arith.constant 0 : index
    %c0_4 = arith.constant 0 : index
    %2 = vector.load %arg3[%c0_3, %c0_4] : memref<1x128xf32, #tpu.memory_space<vmem>>, vector<1x128xf32>
    %cst = arith.constant dense<0.000000e+00> : vector<16x128xf32>
    %3 = tpu.matmul %0, %1, %cst {dimension_numbers = #tpu.dot_dimension_numbers<[1], [0], [0], [1], [0, 0, 1, 1], [], []>} : vector<16x32xbf16>, vector<32x128xbf16>, vector<16x128xf32> -> vector<16x128xf32>
    %4 = vector.broadcast %2 : vector<1x128xf32> to vector<16x128xf32>
    %5 = arith.addf %3, %4 : vector<16x128xf32>
    %cst_5 = arith.constant 0.000000e+00 : f32
    %6 = vector.broadcast %cst_5 : f32 to vector<16x128xf32>
    %7 = arith.maximumf %5, %6 : vector<16x128xf32>
    %c0_6 = arith.constant 0 : index
    %c0_7 = arith.constant 0 : index
    %8 = vector.load %arg4[%c0_6, %c0_7] : memref<128x128xbf16, #tpu.memory_space<vmem>>, vector<128x128xbf16>
    %c0_8 = arith.constant 0 : index
    %c0_9 = arith.constant 0 : index
    %9 = vector.load %arg5[%c0_8, %c0_9] : memref<1x128xf32, #tpu.memory_space<vmem>>, vector<1x128xf32>
    %10 = arith.truncf %7 : vector<16x128xf32> to vector<16x128xbf16>
    %cst_10 = arith.constant dense<0.000000e+00> : vector<16x128xf32>
    %11 = tpu.matmul %10, %8, %cst_10 {dimension_numbers = #tpu.dot_dimension_numbers<[1], [0], [0], [1], [0, 0, 1, 1], [], []>} : vector<16x128xbf16>, vector<128x128xbf16>, vector<16x128xf32> -> vector<16x128xf32>
    %12 = vector.broadcast %9 : vector<1x128xf32> to vector<16x128xf32>
    %13 = arith.addf %11, %12 : vector<16x128xf32>
    %14 = arith.truncf %13 : vector<16x128xf32> to vector<16x128xbf16>
    %c0_11 = arith.constant 0 : index
    %c0_12 = arith.constant 0 : index
    %15 = vector.load %arg6[%c0_11, %c0_12] : memref<16x128xbf16, #tpu.memory_space<vmem>>, vector<16x128xbf16>
    tpu.vector_store %arg6[%c0_11, %c0_12], %14 {strides = array<i32>} : memref<16x128xbf16, #tpu.memory_space<vmem>>, vector<16x128xbf16>,
    return
  }
  func.func @transform_0(%arg0: i32) -> (i32, i32) {
    %c0_i32 = arith.constant 0 : i32
    %c0_i32_0 = arith.constant 0 : i32
    return %arg0, %c0_i32 : i32, i32
  }
  func.func @transform_1(%arg0: i32) -> (i32, i32) {
    %c0_i32 = arith.constant 0 : i32
    %c0_i32_0 = arith.constant 0 : i32
    %c0_i32_1 = arith.constant 0 : i32
    return %c0_i32, %c0_i32_0 : i32, i32
  }
  func.func @transform_2(%arg0: i32) -> (i32, i32) {
    %c0_i32 = arith.constant 0 : i32
    %c0_i32_0 = arith.constant 0 : i32
    %c0_i32_1 = arith.constant 0 : i32
    return %c0_i32, %c0_i32_0 : i32, i32
  }
  func.func @transform_3(%arg0: i32) -> (i32, i32) {
    %c0_i32 = arith.constant 0 : i32
    %c0_i32_0 = arith.constant 0 : i32
    %c0_i32_1 = arith.constant 0 : i32
    return %c0_i32, %c0_i32_0 : i32, i32
  }
  func.func @transform_4(%arg0: i32) -> (i32, i32) {
    %c0_i32 = arith.constant 0 : i32
    %c0_i32_0 = arith.constant 0 : i32
    %c0_i32_1 = arith.constant 0 : i32
    return %c0_i32, %c0_i32_0 : i32, i32
  }
  func.func @transform_5(%arg0: i32) -> (i32, i32) {
    %c0_i32 = arith.constant 0 : i32
    %c0_i32_0 = arith.constant 0 : i32
    return %arg0, %c0_i32 : i32, i32
  }
}

</mosaic_0001>

<llo_original>
// kernel: tpu_custom_call.1
$region0: #{tpu_custom_call.1}
  #allocation0 [shape = 'u32[]', space=smem, size = 0x4, offset = 0x4, fixed_abs, tag = 'smem constant byte address 0x4 - core index']
  #allocation1 [shape = 'u32[144,128]{1,0:T(1,128)}', space=vmem, size = 0x12000, scoped, tag = 'internal scratch']
  %s0 = inlined_call_operand.hbm [shape: bf16[16,32], index: 0, kind: input, shape index: {}]
  %s1 = inlined_call_operand.hbm [shape: bf16[32,128], index: 1, kind: input, shape index: {}]
  %s2 = inlined_call_operand.vmem [shape: f32[1,128], index: 2, kind: input, shape index: {}]
  %s3 = inlined_call_operand.hbm [shape: bf16[128,128], index: 3, kind: input, shape index: {}]
  %s4 = inlined_call_operand.vmem [shape: f32[1,128], index: 4, kind: input, shape index: {}]
  %s5 = inlined_call_operand.hbm [shape: bf16[16,128], index: 5, kind: output, shape index: {}]
  %s6 = sld [smem:[#allocation0]]
  $region42: #{tpu_custom_call.1} parent=0
    _
  %s8 = ssub.s32 1, %s6
  %s9 = scalar_select 0, %s8, %s6
  $region1: #{tpu_custom_call.1} parent=0
    #allocation2 [shape = 'u8[4096]{0}', space=vmem, size = 0x1000, scoped, tag = 'input window, operand 0, single buffered']
    #allocation3 [shape = 's32[1]{0}', space=sflag, size = 0x4, scoped, tag = 'scoped memory for tpu_custom_call.1']
    #allocation4 [shape = 's32[1]{0}', space=sflag, size = 0x4, scoped, tag = 'scoped memory for tpu_custom_call.1']
    #allocation5 [shape = 'u8[8192]{0}', space=vmem, size = 0x2000, scoped, tag = 'input window, operand 1, single buffered']
    #allocation6 [shape = 's32[1]{0}', space=sflag, size = 0x4, scoped, tag = 'scoped memory for tpu_custom_call.1']
    #allocation7 [shape = 'u8[32768]{0}', space=vmem, size = 0x8000, scoped, tag = 'input window, operand 3, single buffered']
    #allocation8 [shape = 'u8[4096]{0}', space=vmem, size = 0x1000, scoped, tag = 'output window, operand 0, single buffered']
    %10 = vsyncpa [#allocation3], 0
    %11 = vsyncpa [#allocation6], 0
    %12 = vsyncpa [#allocation4], 0
    // Predicated region
    $region2: #{tpu_custom_call.1} parent=1 // pred_check
      _
    $region3: #{tpu_custom_call.1} parent=1 // pred_check_branch
      %14 = sbr.rel (0) target = $region5
    $region4: #{tpu_custom_call.1} parent=1 // pred_region
      %s16 = ssub.s32 128, 128
      %17 = vsyncadd [#allocation3], %s16
      %s18 = sshll.u32 [#allocation2], 4
      %s19 = int_to_ptr.vmem [resolvable:$true] %s18
      %24 = dma.hbm_to_vmem [thread:$0]  %s0, 128, %s19, [#allocation3], 64, 64, 4
    $region5: #{tpu_custom_call.1} parent=1 // pred_fallthru
      _
    // Predicated region
    $region6: #{tpu_custom_call.1} parent=1 // pred_check
      _
    $region7: #{tpu_custom_call.1} parent=1 // pred_check_branch
      %26 = sbr.rel (0) target = $region9
    $region8: #{tpu_custom_call.1} parent=1 // pred_region
      %s28 = ssub.s32 256, 256
      %29 = vsyncadd [#allocation6], %s28
      %s30 = sshll.u32 [#allocation5], 4
      %s31 = int_to_ptr.vmem [resolvable:$true] %s30
      %36 = dma.hbm_to_vmem [thread:$0]  %s1, 256, %s31, [#allocation6], 64, 64, 4
    $region9: #{tpu_custom_call.1} parent=1 // pred_fallthru
      _
    // Predicated region
    $region10: #{tpu_custom_call.1} parent=1 // pred_check
      _
    $region11: #{tpu_custom_call.1} parent=1 // pred_check_branch
      %38 = sbr.rel (0) target = $region13
    $region12: #{tpu_custom_call.1} parent=1 // pred_region
      _
    $region13: #{tpu_custom_call.1} parent=1 // pred_fallthru
      _
    // Predicated region
    $region14: #{tpu_custom_call.1} parent=1 // pred_check
      _
    $region15: #{tpu_custom_call.1} parent=1 // pred_check_branch
      %40 = sbr.rel (0) target = $region17
    $region16: #{tpu_custom_call.1} parent=1 // pred_region
      %s42 = ssub.s32 1024, 1024
      %43 = vsyncadd [#allocation6], %s42
      %s44 = sshll.u32 [#allocation7], 4
      %s45 = int_to_ptr.vmem [resolvable:$true] %s44
      %50 = dma.hbm_to_vmem [thread:$0]  %s3, 1024, %s45, [#allocation6], 64, 64, 4
    $region17: #{tpu_custom_call.1} parent=1 // pred_fallthru
      _
    // Predicated region
    $region18: #{tpu_custom_call.1} parent=1 // pred_check
      _
    $region19: #{tpu_custom_call.1} parent=1 // pred_check_branch
      %52 = sbr.rel (0) target = $region21
    $region20: #{tpu_custom_call.1} parent=1 // pred_region
      _
    $region21: #{tpu_custom_call.1} parent=1 // pred_fallthru
      _
    // Predicated region
    $region22: #{tpu_custom_call.1} parent=1 // pred_check
      _
    $region23: #{tpu_custom_call.1} parent=1 // pred_check_branch
      %54 = sbr.rel (0) target = $region25
    $region24: #{tpu_custom_call.1} parent=1 // pred_region
      %55 = dma.done [#allocation3], 128
    $region25: #{tpu_custom_call.1} parent=1 // pred_fallthru
      _
    // Predicated region
    $region26: #{tpu_custom_call.1} parent=1 // pred_check
      _
    $region27: #{tpu_custom_call.1} parent=1 // pred_check_branch
      %57 = sbr.rel (0) target = $region29
    $region28: #{tpu_custom_call.1} parent=1 // pred_region
      %58 = dma.done [#allocation6], 256
    $region29: #{tpu_custom_call.1} parent=1 // pred_fallthru
      _
    // Predicated region
    $region30: #{tpu_custom_call.1} parent=1 // pred_check
      _
    $region31: #{tpu_custom_call.1} parent=1 // pred_check_branch
      %60 = sbr.rel (0) target = $region33
    $region32: #{tpu_custom_call.1} parent=1 // pred_region
      %61 = dma.done [#allocation6], 1024
    $region33: #{tpu_custom_call.1} parent=1 // pred_fallthru
      _
    %v63 = vld [vmem:[#allocation2] sm:$0xf]
    %v64 = vld [vmem:[#allocation2 + $0x4] sm:$0xf]
    %v65 = vld [vmem:[#allocation5] sm:$0xf]
    %v66 = vld [vmem:[#allocation5 + $0x4] sm:$0xf]
    %v67 = vld [vmem:[#allocation5 + $0x8] sm:$0xf]
    %v68 = vld [vmem:[#allocation5 + $0xc] sm:$0xf]
    %v69 = vld [vmem:[%s2] sm:$0x1]
    %v71 = vlaneseq
    %v72 = vshrl.u32 %v71, 7
    %v73 = vsub.s32 0, %v72
    %v74 = vrot.slane %v69, %v73
    %v78 = vunpack.c.l.b16 %v63
    %v79 = vunpack.c.l.b16 %v64
    %v80 = vpack.c.b16 %v79, %v78
    %v85 = vunpack.c.l.b16 %v65
    %v86 = vunpack.c.l.b16 %v66
    %v87 = vunpack.c.l.b16 %v67
    %v88 = vunpack.c.l.b16 %v68
    %v89 = vpack.c.b16 %v86, %v85
    %v90 = vpack.c.b16 %v88, %v87
    %vm93 = vcmask 261120
    %v95 = vsel %vm93, %v80, 0
    %97 = vmatprep.subr.bf16.mxu0 0
    %98 = vmatpush1.bf16.msra.mxu0 %v89
    %99 = vmatprep.subr.bf16.mxu0 0
    %100 = vmatpush1.bf16.msra.mxu0 %v90
    %101 = vmatprep.subr.bf16.mxu0 0
    %102 = vmatpush1.bf16.msra.mxu0 0
    %103 = vmatprep.subr.bf16.mxu0 0
    %104 = vmatpush1.bf16.msra.mxu0 0
    %105 = vmatprep.subr.bf16.mxu0 0
    %106 = vmatpush1.bf16.msra.mxu0 0
    %107 = vmatprep.subr.bf16.mxu0 0
    %108 = vmatpush1.bf16.msra.mxu0 0
    %109 = vmatprep.subr.bf16.mxu0 0
    %110 = vmatpush1.bf16.msra.mxu0 0
    %111 = vmatprep.subr.bf16.mxu0 0
    %112 = vmatpush1.bf16.msra.mxu0 0
    %113 = vmatprep.subr.bf16.mxu0 0
    %114 = vmatpush1.bf16.msra.mxu0 0
    %115 = vmatprep.subr.bf16.mxu0 0
    %116 = vmatpush1.bf16.msra.mxu0 0
    %117 = vmatprep.subr.bf16.mxu0 0
    %118 = vmatpush1.bf16.msra.mxu0 0
    %119 = vmatprep.subr.bf16.mxu0 0
    %120 = vmatpush1.bf16.msra.mxu0 0
    %121 = vmatprep.subr.bf16.mxu0 0
    %122 = vmatpush1.bf16.msra.mxu0 0
    %123 = vmatprep.subr.bf16.mxu0 0
    %124 = vmatpush1.bf16.msra.mxu0 0
    %125 = vmatprep.subr.bf16.mxu0 0
    %126 = vmatpush1.bf16.msra.mxu0 0
    %127 = vmatprep.subr.bf16.mxu0 0
    %128 = vmatpush1.bf16.msra.mxu0 0
    %129 = vmatprep.mubr.bf16.mxu0 0
    %130 = vmatmul.mubr.bf16.gmra.mrb[0].mxu0 %v95
    %v131 = vpop.f32.mrb[0].mxu0
    %v132 = vadd.f32 %v74, %v131
    %v133 = vpop.f32.mrb[0].mxu0
    %v134 = vpop.f32.mrb[0].mxu0
    %v135 = vadd.f32 %v74, %v134
    %v136 = vpop.f32.mrb[0].mxu0
    %137 = vdwg.mxu0
    %v138 = vmax.f32 %v132, 0.0
    %v139 = vmax.f32 %v135, 0.0
    %v140 = vld [vmem:[#allocation7] sm:$0xf]
    %v141 = vld [vmem:[#allocation7 + $0x4] sm:$0xf]
    %v142 = vld [vmem:[#allocation7 + $0x8] sm:$0xf]
    %v143 = vld [vmem:[#allocation7 + $0xc] sm:$0xf]
    %v144 = vld [vmem:[#allocation7 + $0x10] sm:$0xf]
    %v145 = vld [vmem:[#allocation7 + $0x14] sm:$0xf]
    %v146 = vld [vmem:[#allocation7 + $0x18] sm:$0xf]
    %v147 = vld [vmem:[#allocation7 + $0x1c] sm:$0xf]
    %v148 = vld [vmem:[#allocation7 + $0x20] sm:$0xf]
    %v149 = vld [vmem:[#allocation7 + $0x24] sm:$0xf]
    %v150 = vld [vmem:[#allocation7 + $0x28] sm:$0xf]
    %v151 = vld [vmem:[#allocation7 + $0x2c] sm:$0xf]
    %v152 = vld [vmem:[#allocation7 + $0x30] sm:$0xf]
    %v153 = vld [vmem:[#allocation7 + $0x34] sm:$0xf]
    %v154 = vld [vmem:[#allocation7 + $0x38] sm:$0xf]
    %v155 = vld [vmem:[#allocation7 + $0x3c] sm:$0xf]
    %v156 = vld [vmem:[%s4] sm:$0x1]
    %v157 = vpack.c.bf16 %v139, %v138
    %v159 = vlaneseq
    %v160 = vshrl.u32 %v159, 7
    %v161 = vsub.s32 0, %v160
    %v162 = vrot.slane %v156, %v161
    %v180 = vunpack.c.l.b16 %v140
    %v181 = vunpack.c.l.b16 %v141
    %v182 = vunpack.c.l.b16 %v142
    %v183 = vunpack.c.l.b16 %v143
    %v184 = vunpack.c.l.b16 %v144
    %v185 = vunpack.c.l.b16 %v145
    %v186 = vunpack.c.l.b16 %v146
    %v187 = vunpack.c.l.b16 %v147
    %v188 = vunpack.c.l.b16 %v148
    %v189 = vunpack.c.l.b16 %v149
    %v190 = vunpack.c.l.b16 %v150
    %v191 = vunpack.c.l.b16 %v151
    %v192 = vunpack.c.l.b16 %v152
    %v193 = vunpack.c.l.b16 %v153
    %v194 = vunpack.c.l.b16 %v154
    %v195 = vunpack.c.l.b16 %v155
    %v196 = vpack.c.b16 %v181, %v180
    %v197 = vpack.c.b16 %v183, %v182
    %v198 = vpack.c.b16 %v185, %v184
    %v199 = vpack.c.b16 %v187, %v186
    %v200 = vpack.c.b16 %v189, %v188
    %v201 = vpack.c.b16 %v191, %v190
    %v202 = vpack.c.b16 %v193, %v192
    %v203 = vpack.c.b16 %v195, %v194
    %212 = vmatprep.subr.bf16.mxu0 0
    %213 = vmatpush1.bf16.msra.mxu0 %v196
    %214 = vmatprep.subr.bf16.mxu0 0
    %215 = vmatpush1.bf16.msra.mxu0 %v197
    %216 = vmatprep.subr.bf16.mxu0 0
    %217 = vmatpush1.bf16.msra.mxu0 %v198
    %218 = vmatprep.subr.bf16.mxu0 0
    %219 = vmatpush1.bf16.msra.mxu0 %v199
    %220 = vmatprep.subr.bf16.mxu0 0
    %221 = vmatpush1.bf16.msra.mxu0 %v200
    %222 = vmatprep.subr.bf16.mxu0 0
    %223 = vmatpush1.bf16.msra.mxu0 %v201
    %224 = vmatprep.subr.bf16.mxu0 0
    %225 = vmatpush1.bf16.msra.mxu0 %v202
    %226 = vmatprep.subr.bf16.mxu0 0
    %227 = vmatpush1.bf16.msra.mxu0 %v203
    %228 = vmatprep.subr.bf16.mxu0 0
    %229 = vmatpush1.bf16.msra.mxu0 0
    %230 = vmatprep.subr.bf16.mxu0 0
    %231 = vmatpush1.bf16.msra.mxu0 0
    %232 = vmatprep.subr.bf16.mxu0 0
    %233 = vmatpush1.bf16.msra.mxu0 0
    %234 = vmatprep.subr.bf16.mxu0 0
    %235 = vmatpush1.bf16.msra.mxu0 0
    %236 = vmatprep.subr.bf16.mxu0 0
    %237 = vmatpush1.bf16.msra.mxu0 0
    %238 = vmatprep.subr.bf16.mxu0 0
    %239 = vmatpush1.bf16.msra.mxu0 0
    %240 = vmatprep.subr.bf16.mxu0 0
    %241 = vmatpush1.bf16.msra.mxu0 0
    %242 = vmatprep.subr.bf16.mxu0 0
    %243 = vmatpush1.bf16.msra.mxu0 0
    %244 = vmatprep.mubr.bf16.mxu0 0
    %245 = vmatmul.mubr.bf16.gmra.mrb[0].mxu0 %v157
    %v246 = vpop.f32.mrb[0].mxu0
    %v247 = vadd.f32 %v162, %v246
    %v248 = vpop.f32.mrb[0].mxu0
    %v249 = vpop.f32.mrb[0].mxu0
    %v250 = vadd.f32 %v162, %v249
    %v251 = vpop.f32.mrb[0].mxu0
    %252 = vdwg.mxu0
    %v253 = vpack.c.bf16 %v250, %v247
    %v255 = vunpack.c.l.b16 %v253
    %v256 = vunpack.c.h.b16 %v253
    %v257 = vpack.c.b16 %v255, %v255
    %v258 = vpack.c.b16 %v256, %v256
    %261 = vst [vmem:[#allocation8] sm:$0xf] %v257
    %262 = vst [vmem:[#allocation8 + $0x4] sm:$0xf] %v258
    // Predicated region
    $region34: #{tpu_custom_call.1} parent=1 // pred_check
      _
    $region35: #{tpu_custom_call.1} parent=1 // pred_check_branch
      %264 = sbr.rel (0) target = $region37
    $region36: #{tpu_custom_call.1} parent=1 // pred_region
      %s266 = ssub.s32 128, 128
      %267 = vsyncadd [#allocation4], %s266
      %s268 = sshll.u32 [#allocation8], 4
      %s269 = int_to_ptr.vmem [resolvable:$true] %s268
      %274 = dma.vmem_to_hbm [thread:$0]  %s269, 128, %s5, [#allocation4], 64, 64, 4
    $region37: #{tpu_custom_call.1} parent=1 // pred_fallthru
      _
    // Predicated region
    $region38: #{tpu_custom_call.1} parent=1 // pred_check
      _
    $region39: #{tpu_custom_call.1} parent=1 // pred_check_branch
      %276 = sbr.rel (0) target = $region41
    $region40: #{tpu_custom_call.1} parent=1 // pred_region
      %277 = dma.done [#allocation4], 128
    $region41: #{tpu_custom_call.1} parent=1 // pred_fallthru
      _
    %278 = vsyncpa [#allocation3], 1
    %279 = vsyncpa [#allocation6], 1
    %280 = vsyncpa [#allocation4], 1

</llo_original>
